<compile_context>
chip_gen: v6e
topology: v6e:2x2x1
jax: 0.10.0
libtpu: 0.0.40
codegen_flags: <defaults>
</compile_context>

<pallas_src>
import jax
import jax.numpy as jnp
from jax.experimental import pallas as pl
from jax.experimental.pallas import tpu as pltpu

IN_FEATURES = 20
HIDDEN = 256
OUT_FEATURES = 5

IN_PAD = 32      # K pad 20 -> 32 inside the kernel (numerically exact)
MXU_N = 128      # second-matmul column pad (kept MXU/lane aligned in VMEM)
OUT_LANES = 8    # compact HBM output width (5 -> 8); sliced back to 5 in wrapper


def _round_up(n, m):
    return (n + m - 1) // m * m


def mlp_kernel(x_ref, w1_ref, b1_ref, w2_ref, b2_ref, o_ref, xpad_ref):
    tb = xpad_ref.shape[0]

    # In-VMEM bf16 cast + K pad (20 -> 32).  Pad lanes re-zeroed every step so
    # correctness does not depend on which core runs grid step 0.
    xpad_ref[:, :IN_FEATURES] = x_ref[...].astype(jnp.bfloat16)
    xpad_ref[:, IN_FEATURES:] = jnp.zeros((tb, IN_PAD - IN_FEATURES), jnp.bfloat16)

    # Hidden layer: (tb, 32)bf16 @ (32, 256)bf16 -> f32, bias + ReLU in f32.
    h = jnp.dot(xpad_ref[...], w1_ref[...], preferred_element_type=jnp.float32)
    h = jnp.maximum(h + b1_ref[...], 0.0)

    # Output layer: (tb, 256)bf16 @ (256, 128)bf16 -> f32; store only the first
    # 8 lanes (compact HBM output).
    out = jnp.dot(h.astype(w2_ref.dtype), w2_ref[...],
                  preferred_element_type=jnp.float32)
    o_ref[...] = (out[:, :OUT_LANES] + b2_ref[...]).astype(o_ref.dtype)


def prepare_params(w1, b1, w2, b2):
    """One-time padding/casting of the weights (hoisted out of the forward)."""
    w1_p = jnp.zeros((IN_PAD, HIDDEN), jnp.bfloat16).at[:IN_FEATURES, :].set(
        w1.astype(jnp.bfloat16))
    b1_p = b1.reshape(1, HIDDEN).astype(jnp.float32)
    w2_p = jnp.zeros((HIDDEN, MXU_N), jnp.bfloat16).at[:, :OUT_FEATURES].set(
        w2.astype(jnp.bfloat16))
    b2_p = jnp.zeros((1, OUT_LANES), jnp.float32).at[:, :OUT_FEATURES].set(
        b2.reshape(1, OUT_FEATURES).astype(jnp.float32))
    return w1_p, b1_p, w2_p, b2_p


def mlp_forward(x, w1_p, b1_p, w2_p, b2_p, *, tile_b=4096):
    """x: (B, 20) f32.  w1_p/b1_p/w2_p/b2_p: outputs of prepare_params."""
    B = x.shape[0]
    tile_b = _round_up(tile_b, 128)

    # Batch tile: multiple of 128.  For B >= 256 split into >= 2 grid steps so
    # the "parallel" axis can use both TensorCores on v7x; ragged last block is
    # handled by Pallas (masked writeback), so no HBM-side batch padding.
    if B >= 256:
        tb = min(tile_b, _round_up(pl.cdiv(B, 2), 128))
    else:
        tb = min(tile_b, _round_up(B, 128))
    grid = (pl.cdiv(B, tb),)

    flops = 2 * B * (IN_PAD * HIDDEN + HIDDEN * MXU_N)
    bytes_accessed = (x.size * x.dtype.itemsize
                      + B * OUT_LANES * 4
                      + w1_p.size * 2 + b1_p.size * 4
                      + w2_p.size * 2 + b2_p.size * 4)

    out = pl.pallas_call(
        mlp_kernel,
        out_shape=jax.ShapeDtypeStruct((B, OUT_LANES), jnp.float32),
        grid_spec=pltpu.PrefetchScalarGridSpec(
            num_scalar_prefetch=0,
            grid=grid,
            in_specs=[
                pl.BlockSpec((tb, IN_FEATURES), lambda i: (i, 0)),   # x (streamed)
                pl.BlockSpec((IN_PAD, HIDDEN), lambda i: (0, 0)),    # w1 (resident)
                pl.BlockSpec((1, HIDDEN), lambda i: (0, 0)),         # b1 (resident)
                pl.BlockSpec((HIDDEN, MXU_N), lambda i: (0, 0)),     # w2 (resident)
                pl.BlockSpec((1, OUT_LANES), lambda i: (0, 0)),      # b2 (resident)
            ],
            out_specs=pl.BlockSpec((tb, OUT_LANES), lambda i: (i, 0)),
            scratch_shapes=[pltpu.VMEM((tb, IN_PAD), jnp.bfloat16)],  # padded x
        ),
        compiler_params=pltpu.CompilerParams(
            dimension_semantics=("parallel",),
        ),
        cost_estimate=pl.CostEstimate(
            flops=flops, transcendentals=0, bytes_accessed=bytes_accessed),
    )(x, w1_p, b1_p, w2_p, b2_p)

    # Strip the tiny lane padding (8 -> 5); negligible copy.
    return out[:, :OUT_FEATURES]


def init_params(key, in_features=IN_FEATURES, hidden=HIDDEN,
                out_features=OUT_FEATURES, dtype=jnp.float32):
    """Mimics PyTorch nn.Linear default init: U(-1/sqrt(fan_in), 1/sqrt(fan_in))."""
    k1, k2, k3, k4 = jax.random.split(key, 4)
    bound1 = 1.0 / jnp.sqrt(in_features)
    bound2 = 1.0 / jnp.sqrt(hidden)
    # Stored as (in, out) so the kernel computes x @ W (== x @ W_torch.T).
    w1 = jax.random.uniform(k1, (in_features, hidden), dtype, -bound1, bound1)
    b1 = jax.random.uniform(k2, (1, hidden), dtype, -bound1, bound1)
    w2 = jax.random.uniform(k3, (hidden, out_features), dtype, -bound2, bound2)
    b2 = jax.random.uniform(k4, (1, out_features), dtype, -bound2, bound2)
    return w1, b1, w2, b2


if __name__ == "__main__":
    key = jax.random.PRNGKey(0)
    kx, kp = jax.random.split(key)

    w1, b1, w2, b2 = init_params(kp)
    params = prepare_params(w1, b1, w2, b2)          # one-time param prep
    params = tuple(jax.block_until_ready(p) for p in params)

    fwd = jax.jit(mlp_forward)

    def reference_bf16(x):
        # Same numerics as the kernel: bf16 MXU operands, f32 accumulation.
        xb, w1b, w2b = (a.astype(jnp.bfloat16) for a in (x, w1, w2))
        h = jnp.maximum(
            jnp.dot(xb, w1b, preferred_element_type=jnp.float32) + b1, 0.0)
        return jnp.dot(h.astype(jnp.bfloat16), w2b,
                       preferred_element_type=jnp.float32) + b2

    # B=8: single partial tile.  B=300: multi-step grid (2 steps, ragged tail).
    for B in (8, 300):
        x = jax.random.normal(jax.random.fold_in(kx, B), (B, IN_FEATURES),
                              jnp.float32)
        y = jax.block_until_ready(fwd(x, *params))
        assert y.shape == (B, OUT_FEATURES), y.shape

        ref_b = reference_bf16(x)
        assert jnp.allclose(y, ref_b, atol=1e-3, rtol=1e-3), \
            "mismatch vs bf16-operand reference"

        ref_f = jnp.maximum(x @ w1 + b1, 0.0) @ w2 + b2
        assert jnp.allclose(y, ref_f, atol=5e-2, rtol=5e-2), \
            "mismatch vs f32 reference"

    print("KERNEL_OK")
</pallas_src>

<mosaic_0001>
module attributes {stable_mosaic.version = 11 : i64} {
  func.func @mlp_kernel(%arg0: i32, %arg1: memref<128x20xf32, #tpu.memory_space<vmem>>, %arg2: memref<32x256xbf16, #tpu.memory_space<vmem>>, %arg3: memref<1x256xf32, #tpu.memory_space<vmem>>, %arg4: memref<256x128xbf16, #tpu.memory_space<vmem>>, %arg5: memref<1x8xf32, #tpu.memory_space<vmem>>, %arg6: memref<128x8xf32, #tpu.memory_space<vmem>>, %arg7: memref<128x32xbf16, #tpu.memory_space<vmem>>) attributes {dimension_semantics = [#tpu.dimension_semantics<parallel>], iteration_bounds = array<i64: 1>, scalar_prefetch = 0 : i64, scratch_operands = 1 : i64, tpu.core_type = #tpu.core_type<tc>, window_params = [{transform_indices = @transform_0, window_bounds = array<i64: 128, 20>}, {pipeline_mode = #tpu.pipeline_mode<synchronous>, transform_indices = @transform_1, window_bounds = array<i64: 32, 256>}, {pipeline_mode = #tpu.pipeline_mode<synchronous>, transform_indices = @transform_2, window_bounds = array<i64: 1, 256>}, {pipeline_mode = #tpu.pipeline_mode<synchronous>, transform_indices = @transform_3, window_bounds = array<i64: 256, 128>}, {pipeline_mode = #tpu.pipeline_mode<synchronous>, transform_indices = @transform_4, window_bounds = array<i64: 1, 8>}, {transform_indices = @transform_5, window_bounds = array<i64: 128, 8>}]} {
    %c0 = arith.constant 0 : index
    %c0_0 = arith.constant 0 : index
    %0 = vector.load %arg1[%c0, %c0_0] : memref<128x20xf32, #tpu.memory_space<vmem>>, vector<128x20xf32>
    %1 = arith.truncf %0 : vector<128x20xf32> to vector<128x20xbf16>
    %c0_1 = arith.constant 0 : index
    %c0_2 = arith.constant 0 : index
    %2 = vector.load %arg7[%c0_1, %c0_2] : memref<128x32xbf16, #tpu.memory_space<vmem>>, vector<128x20xbf16>
    tpu.vector_store %arg7[%c0_1, %c0_2], %1 {strides = array<i32>} : memref<128x32xbf16, #tpu.memory_space<vmem>>, vector<128x20xbf16>,
    %cst = arith.constant 0.000000e+00 : bf16
    %3 = vector.broadcast %cst : bf16 to vector<128x12xbf16>
    %c0_3 = arith.constant 0 : index
    %c20 = arith.constant 20 : index
    %4 = vector.load %arg7[%c0_3, %c20] : memref<128x32xbf16, #tpu.memory_space<vmem>>, vector<128x12xbf16>
    tpu.vector_store %arg7[%c0_3, %c20], %3 {strides = array<i32>} : memref<128x32xbf16, #tpu.memory_space<vmem>>, vector<128x12xbf16>,
    %c0_4 = arith.constant 0 : index
    %c0_5 = arith.constant 0 : index
    %5 = vector.load %arg7[%c0_4, %c0_5] : memref<128x32xbf16, #tpu.memory_space<vmem>>, vector<128x32xbf16>
    %c0_6 = arith.constant 0 : index
    %c0_7 = arith.constant 0 : index
    %6 = vector.load %arg2[%c0_6, %c0_7] : memref<32x256xbf16, #tpu.memory_space<vmem>>, vector<32x256xbf16>
    %cst_8 = arith.constant dense<0.000000e+00> : vector<128x256xf32>
    %7 = tpu.matmul %5, %6, %cst_8 {dimension_numbers = #tpu.dot_dimension_numbers<[1], [0], [0], [1], [0, 0, 1, 1], [], []>} : vector<128x32xbf16>, vector<32x256xbf16>, vector<128x256xf32> -> vector<128x256xf32>
    %c0_9 = arith.constant 0 : index
    %c0_10 = arith.constant 0 : index
    %8 = vector.load %arg3[%c0_9, %c0_10] : memref<1x256xf32, #tpu.memory_space<vmem>>, vector<1x256xf32>
    %9 = vector.broadcast %8 : vector<1x256xf32> to vector<128x256xf32>
    %10 = arith.addf %7, %9 : vector<128x256xf32>
    %cst_11 = arith.constant 0.000000e+00 : f32
    %11 = vector.broadcast %cst_11 : f32 to vector<128x256xf32>
    %12 = arith.maximumf %10, %11 : vector<128x256xf32>
    %13 = arith.truncf %12 : vector<128x256xf32> to vector<128x256xbf16>
    %c0_12 = arith.constant 0 : index
    %c0_13 = arith.constant 0 : index
    %14 = vector.load %arg4[%c0_12, %c0_13] : memref<256x128xbf16, #tpu.memory_space<vmem>>, vector<256x128xbf16>
    %cst_14 = arith.constant dense<0.000000e+00> : vector<128x128xf32>
    %15 = tpu.matmul %13, %14, %cst_14 {dimension_numbers = #tpu.dot_dimension_numbers<[1], [0], [0], [1], [0, 0, 1, 1], [], []>} : vector<128x256xbf16>, vector<256x128xbf16>, vector<128x128xf32> -> vector<128x128xf32>
    %16 = vector.extract_strided_slice %15 {offsets = [0, 0], sizes = [128, 8], strides = [1, 1]} : vector<128x128xf32> to vector<128x8xf32>
    %c0_15 = arith.constant 0 : index
    %c0_16 = arith.constant 0 : index
    %17 = vector.load %arg5[%c0_15, %c0_16] : memref<1x8xf32, #tpu.memory_space<vmem>>, vector<1x8xf32>
    %18 = vector.broadcast %17 : vector<1x8xf32> to vector<128x8xf32>
    %19 = arith.addf %16, %18 : vector<128x8xf32>
    %c0_17 = arith.constant 0 : index
    %c0_18 = arith.constant 0 : index
    %20 = vector.load %arg6[%c0_17, %c0_18] : memref<128x8xf32, #tpu.memory_space<vmem>>, vector<128x8xf32>
    tpu.vector_store %arg6[%c0_17, %c0_18], %19 {strides = array<i32>} : memref<128x8xf32, #tpu.memory_space<vmem>>, vector<128x8xf32>,
    return
  }
  func.func @transform_0(%arg0: i32) -> (i32, i32) {
    %c0_i32 = arith.constant 0 : i32
    %c0_i32_0 = arith.constant 0 : i32
    return %arg0, %c0_i32 : i32, i32
  }
  func.func @transform_1(%arg0: i32) -> (i32, i32) {
    %c0_i32 = arith.constant 0 : i32
    %c0_i32_0 = arith.constant 0 : i32
    %c0_i32_1 = arith.constant 0 : i32
    return %c0_i32, %c0_i32_0 : i32, i32
  }
  func.func @transform_2(%arg0: i32) -> (i32, i32) {
    %c0_i32 = arith.constant 0 : i32
    %c0_i32_0 = arith.constant 0 : i32
    %c0_i32_1 = arith.constant 0 : i32
    return %c0_i32, %c0_i32_0 : i32, i32
  }
  func.func @transform_3(%arg0: i32) -> (i32, i32) {
    %c0_i32 = arith.constant 0 : i32
    %c0_i32_0 = arith.constant 0 : i32
    %c0_i32_1 = arith.constant 0 : i32
    return %c0_i32, %c0_i32_0 : i32, i32
  }
  func.func @transform_4(%arg0: i32) -> (i32, i32) {
    %c0_i32 = arith.constant 0 : i32
    %c0_i32_0 = arith.constant 0 : i32
    %c0_i32_1 = arith.constant 0 : i32
    return %c0_i32, %c0_i32_0 : i32, i32
  }
  func.func @transform_5(%arg0: i32) -> (i32, i32) {
    %c0_i32 = arith.constant 0 : i32
    %c0_i32_0 = arith.constant 0 : i32
    return %arg0, %c0_i32 : i32, i32
  }
}

</mosaic_0001>

<llo_original>
// kernel: mlp_forward.1
$region0: #{mlp_forward.1}
  #allocation0 [shape = 'u32[]', space=smem, size = 0x4, offset = 0x4, fixed_abs, tag = 'smem constant byte address 0x4 - core index']
  #allocation1 [shape = 'u32[144,128]{1,0:T(1,128)}', space=vmem, size = 0x12000, scoped, tag = 'internal scratch']
  #allocation2 [shape = 'bf16[128,32]{1,0:T(8,128)(2,1)}', space=vmem, size = 0x8000, scoped, tag = 'scratch operand']
  %s0 = inlined_call_operand.hbm [shape: f32[8,20], index: 0, kind: input, shape index: {}]
  %s1 = inlined_call_operand.hbm [shape: bf16[32,256], index: 1, kind: input, shape index: {}]
  %s2 = inlined_call_operand.vmem [shape: f32[1,256], index: 2, kind: input, shape index: {}]
  %s3 = inlined_call_operand.hbm [shape: bf16[256,128], index: 3, kind: input, shape index: {}]
  %s4 = inlined_call_operand.vmem [shape: f32[1,8], index: 4, kind: input, shape index: {}]
  %s5 = inlined_call_operand.hbm [shape: f32[8,8], index: 5, kind: output, shape index: {}]
  %s6 = sld [smem:[#allocation0]]
  $region42: #{mlp_forward.1} parent=0
    _
  %s8 = ssub.s32 1, %s6
  %s9 = scalar_select 0, %s8, %s6
  $region1: #{mlp_forward.1} parent=0
    #allocation3 [shape = 'u8[65536]{0}', space=vmem, size = 0x10000, scoped, tag = 'input window, operand 0, single buffered']
    #allocation4 [shape = 's32[1]{0}', space=sflag, size = 0x4, scoped, tag = 'scoped memory for mlp_forward.1']
    #allocation5 [shape = 's32[1]{0}', space=sflag, size = 0x4, scoped, tag = 'scoped memory for mlp_forward.1']
    #allocation6 [shape = 'u8[16384]{0}', space=vmem, size = 0x4000, scoped, tag = 'input window, operand 1, single buffered']
    #allocation7 [shape = 's32[1]{0}', space=sflag, size = 0x4, scoped, tag = 'scoped memory for mlp_forward.1']
    #allocation8 [shape = 'u8[65536]{0}', space=vmem, size = 0x10000, scoped, tag = 'input window, operand 3, single buffered']
    #allocation9 [shape = 'u8[65536]{0}', space=vmem, size = 0x10000, scoped, tag = 'output window, operand 0, single buffered']
    %10 = vsyncpa [#allocation4], 0
    %11 = vsyncpa [#allocation7], 0
    %12 = vsyncpa [#allocation5], 0
    // Predicated region
    $region2: #{mlp_forward.1} parent=1 // pred_check
      _
    $region3: #{mlp_forward.1} parent=1 // pred_check_branch
      %14 = sbr.rel (0) target = $region5
    $region4: #{mlp_forward.1} parent=1 // pred_region
      %s16 = ssub.s32 2048, 128
      %17 = vsyncadd [#allocation4], %s16
      %s18 = sshll.u32 [#allocation3], 4
      %s19 = int_to_ptr.vmem [resolvable:$true] %s18
      %24 = dma.hbm_to_vmem [thread:$0]  %s0, 128, %s19, [#allocation4], 128, 128, 8
    $region5: #{mlp_forward.1} parent=1 // pred_fallthru
      _
    // Predicated region
    $region6: #{mlp_forward.1} parent=1 // pred_check
      _
    $region7: #{mlp_forward.1} parent=1 // pred_check_branch
      %26 = sbr.rel (0) target = $region9
    $region8: #{mlp_forward.1} parent=1 // pred_region
      %s28 = ssub.s32 512, 512
      %29 = vsyncadd [#allocation7], %s28
      %s30 = sshll.u32 [#allocation6], 4
      %s31 = int_to_ptr.vmem [resolvable:$true] %s30
      %36 = dma.hbm_to_vmem [thread:$0]  %s1, 512, %s31, [#allocation7], 128, 128, 8
    $region9: #{mlp_forward.1} parent=1 // pred_fallthru
      _
    // Predicated region
    $region10: #{mlp_forward.1} parent=1 // pred_check
      _
    $region11: #{mlp_forward.1} parent=1 // pred_check_branch
      %38 = sbr.rel (0) target = $region13
    $region12: #{mlp_forward.1} parent=1 // pred_region
      _
    $region13: #{mlp_forward.1} parent=1 // pred_fallthru
      _
    // Predicated region
    $region14: #{mlp_forward.1} parent=1 // pred_check
      _
    $region15: #{mlp_forward.1} parent=1 // pred_check_branch
      %40 = sbr.rel (0) target = $region17
    $region16: #{mlp_forward.1} parent=1 // pred_region
      %s42 = ssub.s32 2048, 2048
      %43 = vsyncadd [#allocation7], %s42
      %s44 = sshll.u32 [#allocation8], 4
      %s45 = int_to_ptr.vmem [resolvable:$true] %s44
      %50 = dma.hbm_to_vmem [thread:$0]  %s3, 2048, %s45, [#allocation7], 64, 64, 4
    $region17: #{mlp_forward.1} parent=1 // pred_fallthru
      _
    // Predicated region
    $region18: #{mlp_forward.1} parent=1 // pred_check
      _
    $region19: #{mlp_forward.1} parent=1 // pred_check_branch
      %52 = sbr.rel (0) target = $region21
    $region20: #{mlp_forward.1} parent=1 // pred_region
      _
    $region21: #{mlp_forward.1} parent=1 // pred_fallthru
      _
    // Predicated region
    $region22: #{mlp_forward.1} parent=1 // pred_check
      _
    $region23: #{mlp_forward.1} parent=1 // pred_check_branch
      %54 = sbr.rel (0) target = $region25
    $region24: #{mlp_forward.1} parent=1 // pred_region
      %55 = dma.done [#allocation4], 2048
    $region25: #{mlp_forward.1} parent=1 // pred_fallthru
      _
    // Predicated region
    $region26: #{mlp_forward.1} parent=1 // pred_check
      _
    $region27: #{mlp_forward.1} parent=1 // pred_check_branch
      %57 = sbr.rel (0) target = $region29
    $region28: #{mlp_forward.1} parent=1 // pred_region
      %58 = dma.done [#allocation7], 512
    $region29: #{mlp_forward.1} parent=1 // pred_fallthru
      _
    // Predicated region
    $region30: #{mlp_forward.1} parent=1 // pred_check
      _
    $region31: #{mlp_forward.1} parent=1 // pred_check_branch
      %60 = sbr.rel (0) target = $region33
    $region32: #{mlp_forward.1} parent=1 // pred_region
      %61 = dma.done [#allocation7], 2048
    $region33: #{mlp_forward.1} parent=1 // pred_fallthru
      _
    %v63 = vld [vmem:[#allocation3] sm:$0xff]
    %v64 = vld [vmem:[#allocation3 + $0x8] sm:$0xff]
    %v65 = vld [vmem:[#allocation3 + $0x10] sm:$0xff]
    %v66 = vld [vmem:[#allocation3 + $0x18] sm:$0xff]
    %v67 = vld [vmem:[#allocation3 + $0x20] sm:$0xff]
    %v68 = vld [vmem:[#allocation3 + $0x28] sm:$0xff]
    %v69 = vld [vmem:[#allocation3 + $0x30] sm:$0xff]
    %v70 = vld [vmem:[#allocation3 + $0x38] sm:$0xff]
    %v71 = vld [vmem:[#allocation3 + $0x40] sm:$0xff]
    %v72 = vld [vmem:[#allocation3 + $0x48] sm:$0xff]
    %v73 = vld [vmem:[#allocation3 + $0x50] sm:$0xff]
    %v74 = vld [vmem:[#allocation3 + $0x58] sm:$0xff]
    %v75 = vld [vmem:[#allocation3 + $0x60] sm:$0xff]
    %v76 = vld [vmem:[#allocation3 + $0x68] sm:$0xff]
    %v77 = vld [vmem:[#allocation3 + $0x70] sm:$0xff]
    %v78 = vld [vmem:[#allocation3 + $0x78] sm:$0xff]
    %v79 = vpack.c.bf16 %v64, %v63
    %v80 = vpack.c.bf16 %v66, %v65
    %v81 = vpack.c.bf16 %v68, %v67
    %v82 = vpack.c.bf16 %v70, %v69
    %v83 = vpack.c.bf16 %v72, %v71
    %v84 = vpack.c.bf16 %v74, %v73
    %v85 = vpack.c.bf16 %v76, %v75
    %v86 = vpack.c.bf16 %v78, %v77
    %v95 = vunpack.c.l.b16 %v79
    %v96 = vunpack.c.h.b16 %v79
    %v97 = vunpack.c.l.b16 %v80
    %v98 = vunpack.c.h.b16 %v80
    %v99 = vunpack.c.l.b16 %v81
    %v100 = vunpack.c.h.b16 %v81
    %v101 = vunpack.c.l.b16 %v82
    %v102 = vunpack.c.h.b16 %v82
    %v103 = vunpack.c.l.b16 %v83
    %v104 = vunpack.c.h.b16 %v83
    %v105 = vunpack.c.l.b16 %v84
    %v106 = vunpack.c.h.b16 %v84
    %v107 = vunpack.c.l.b16 %v85
    %v108 = vunpack.c.h.b16 %v85
    %v109 = vunpack.c.l.b16 %v86
    %v110 = vunpack.c.h.b16 %v86
    %v111 = vpack.c.b16 %v95, %v95
    %v112 = vpack.c.b16 %v96, %v96
    %v113 = vpack.c.b16 %v97, %v97
    %v114 = vpack.c.b16 %v98, %v98
    %v115 = vpack.c.b16 %v99, %v99
    %v116 = vpack.c.b16 %v100, %v100
    %v117 = vpack.c.b16 %v101, %v101
    %v118 = vpack.c.b16 %v102, %v102
    %v119 = vpack.c.b16 %v103, %v103
    %v120 = vpack.c.b16 %v104, %v104
    %v121 = vpack.c.b16 %v105, %v105
    %v122 = vpack.c.b16 %v106, %v106
    %v123 = vpack.c.b16 %v107, %v107
    %v124 = vpack.c.b16 %v108, %v108
    %v125 = vpack.c.b16 %v109, %v109
    %v126 = vpack.c.b16 %v110, %v110
    %vm143 = vcmask 158720
    %144 = vst.msk [vmem:[#allocation2] sm:$0xf] %vm143, %v111
    %145 = vst.msk [vmem:[#allocation2 + $0x4] sm:$0xf] %vm143, %v112
    %146 = vst.msk [vmem:[#allocation2 + $0x8] sm:$0xf] %vm143, %v113
    %147 = vst.msk [vmem:[#allocation2 + $0xc] sm:$0xf] %vm143, %v114
    %148 = vst.msk [vmem:[#allocation2 + $0x10] sm:$0xf] %vm143, %v115
    %149 = vst.msk [vmem:[#allocation2 + $0x14] sm:$0xf] %vm143, %v116
    %150 = vst.msk [vmem:[#allocation2 + $0x18] sm:$0xf] %vm143, %v117
    %151 = vst.msk [vmem:[#allocation2 + $0x1c] sm:$0xf] %vm143, %v118
    %152 = vst.msk [vmem:[#allocation2 + $0x20] sm:$0xf] %vm143, %v119
    %153 = vst.msk [vmem:[#allocation2 + $0x24] sm:$0xf] %vm143, %v120
    %154 = vst.msk [vmem:[#allocation2 + $0x28] sm:$0xf] %vm143, %v121
    %155 = vst.msk [vmem:[#allocation2 + $0x2c] sm:$0xf] %vm143, %v122
    %156 = vst.msk [vmem:[#allocation2 + $0x30] sm:$0xf] %vm143, %v123
    %157 = vst.msk [vmem:[#allocation2 + $0x34] sm:$0xf] %vm143, %v124
    %158 = vst.msk [vmem:[#allocation2 + $0x38] sm:$0xf] %vm143, %v125
    %159 = vst.msk [vmem:[#allocation2 + $0x3c] sm:$0xf] %vm143, %v126
    %vm160 = vcmask 257184
    %161 = vst.msk [vmem:[#allocation2] sm:$0xf] %vm160, 0
    %162 = vst.msk [vmem:[#allocation2 + $0x4] sm:$0xf] %vm160, 0
    %163 = vst.msk [vmem:[#allocation2 + $0x8] sm:$0xf] %vm160, 0
    %164 = vst.msk [vmem:[#allocation2 + $0xc] sm:$0xf] %vm160, 0
    %165 = vst.msk [vmem:[#allocation2 + $0x10] sm:$0xf] %vm160, 0
    %166 = vst.msk [vmem:[#allocation2 + $0x14] sm:$0xf] %vm160, 0
    %167 = vst.msk [vmem:[#allocation2 + $0x18] sm:$0xf] %vm160, 0
    %168 = vst.msk [vmem:[#allocation2 + $0x1c] sm:$0xf] %vm160, 0
    %169 = vst.msk [vmem:[#allocation2 + $0x20] sm:$0xf] %vm160, 0
    %170 = vst.msk [vmem:[#allocation2 + $0x24] sm:$0xf] %vm160, 0
    %171 = vst.msk [vmem:[#allocation2 + $0x28] sm:$0xf] %vm160, 0
    %172 = vst.msk [vmem:[#allocation2 + $0x2c] sm:$0xf] %vm160, 0
    %173 = vst.msk [vmem:[#allocation2 + $0x30] sm:$0xf] %vm160, 0
    %174 = vst.msk [vmem:[#allocation2 + $0x34] sm:$0xf] %vm160, 0
    %175 = vst.msk [vmem:[#allocation2 + $0x38] sm:$0xf] %vm160, 0
    %176 = vst.msk [vmem:[#allocation2 + $0x3c] sm:$0xf] %vm160, 0
    %v177 = vld [vmem:[#allocation2] sm:$0xf]
    %v178 = vld [vmem:[#allocation2 + $0x4] sm:$0xf]
    %v179 = vld [vmem:[#allocation2 + $0x8] sm:$0xf]
    %v180 = vld [vmem:[#allocation2 + $0xc] sm:$0xf]
    %v181 = vld [vmem:[#allocation2 + $0x10] sm:$0xf]
    %v182 = vld [vmem:[#allocation2 + $0x14] sm:$0xf]
    %v183 = vld [vmem:[#allocation2 + $0x18] sm:$0xf]
    %v184 = vld [vmem:[#allocation2 + $0x1c] sm:$0xf]
    %v185 = vld [vmem:[#allocation2 + $0x20] sm:$0xf]
    %v186 = vld [vmem:[#allocation2 + $0x24] sm:$0xf]
    %v187 = vld [vmem:[#allocation2 + $0x28] sm:$0xf]
    %v188 = vld [vmem:[#allocation2 + $0x2c] sm:$0xf]
    %v189 = vld [vmem:[#allocation2 + $0x30] sm:$0xf]
    %v190 = vld [vmem:[#allocation2 + $0x34] sm:$0xf]
    %v191 = vld [vmem:[#allocation2 + $0x38] sm:$0xf]
    %v192 = vld [vmem:[#allocation2 + $0x3c] sm:$0xf]
    %v193 = vld [vmem:[#allocation6] sm:$0xff]
    %v194 = vld [vmem:[#allocation6 + $0x8] sm:$0xff]
    %v195 = vld [vmem:[#allocation6 + $0x10] sm:$0xff]
    %v196 = vld [vmem:[#allocation6 + $0x18] sm:$0xff]
    %v197 = vld [vmem:[%s2] sm:$0x3]
    %v199 = vlaneseq
    %v200 = vshrl.u32 %v199, 7
    %v201 = vsub.s32 0, %v200
    %v202 = vrot.slane %v197, %v201
    %v203 = vlaneseq
    %v204 = vshrl.u32 %v203, 7
    %v205 = vsub.s32 1, %v204
    %v206 = vrot.slane %v197, %v205
    %v225 = vunpack.c.l.b16 %v177
    %v226 = vunpack.c.l.b16 %v178
    %v227 = vunpack.c.l.b16 %v179
    %v228 = vunpack.c.l.b16 %v180
    %v229 = vunpack.c.l.b16 %v181
    %v230 = vunpack.c.l.b16 %v182
    %v231 = vunpack.c.l.b16 %v183
    %v232 = vunpack.c.l.b16 %v184
    %v233 = vunpack.c.l.b16 %v185
    %v234 = vunpack.c.l.b16 %v186
    %v235 = vunpack.c.l.b16 %v187
    %v236 = vunpack.c.l.b16 %v188
    %v237 = vunpack.c.l.b16 %v189
    %v238 = vunpack.c.l.b16 %v190
    %v239 = vunpack.c.l.b16 %v191
    %v240 = vunpack.c.l.b16 %v192
    %v241 = vpack.c.b16 %v226, %v225
    %v242 = vpack.c.b16 %v228, %v227
    %v243 = vpack.c.b16 %v230, %v229
    %v244 = vpack.c.b16 %v232, %v231
    %v245 = vpack.c.b16 %v234, %v233
    %v246 = vpack.c.b16 %v236, %v235
    %v247 = vpack.c.b16 %v238, %v237
    %v248 = vpack.c.b16 %v240, %v239
    %v253 = vunpack.c.l.b16 %v193
    %v254 = vunpack.c.h.b16 %v193
    %v255 = vunpack.c.l.b16 %v194
    %v256 = vunpack.c.h.b16 %v194
    %v257 = vunpack.c.l.b16 %v195
    %v258 = vunpack.c.h.b16 %v195
    %v259 = vunpack.c.l.b16 %v196
    %v260 = vunpack.c.h.b16 %v196
    %v261 = vpack.c.b16 %v255, %v253
    %v262 = vpack.c.b16 %v256, %v254
    %v263 = vpack.c.b16 %v259, %v257
    %v264 = vpack.c.b16 %v260, %v258
    %vm269 = vcmask 261120
    %v271 = vsel %vm269, %v241, 0
    %v274 = vsel %vm269, %v242, 0
    %v277 = vsel %vm269, %v243, 0
    %v280 = vsel %vm269, %v244, 0
    %v283 = vsel %vm269, %v245, 0
    %v286 = vsel %vm269, %v246, 0
    %v289 = vsel %vm269, %v247, 0
    %v292 = vsel %vm269, %v248, 0
    %294 = vmatprep.subr.bf16.mxu0 0
    %295 = vmatpush1.bf16.msra.mxu0 0
    %296 = vmatprep.subr.bf16.mxu0 0
    %297 = vmatpush1.bf16.msra.mxu0 0
    %298 = vmatprep.subr.bf16.mxu0 0
    %299 = vmatpush1.bf16.msra.mxu0 0
    %300 = vmatprep.subr.bf16.mxu0 0
    %301 = vmatpush1.bf16.msra.mxu0 0
    %302 = vmatprep.subr.bf16.mxu0 0
    %303 = vmatpush1.bf16.msra.mxu0 0
    %304 = vmatprep.subr.bf16.mxu0 0
    %305 = vmatpush1.bf16.msra.mxu0 0
    %306 = vmatprep.subr.bf16.mxu0 %v264
    %307 = vmatpush1.bf16.msra.mxu0 %v263
    %308 = vmatprep.subr.bf16.mxu0 %v262
    %309 = vmatpush1.bf16.msra.mxu0 %v261
    %310 = vmatprep.subr.bf16.mxu0 0
    %311 = vmatpush2.bf16.msra.mxu0 0
    %312 = vmatprep.subr.bf16.mxu0 0
    %313 = vmatpush2.bf16.msra.mxu0 0
    %314 = vmatprep.subr.bf16.mxu0 0
    %315 = vmatpush2.bf16.msra.mxu0 0
    %316 = vmatprep.subr.bf16.mxu0 0
    %317 = vmatpush2.bf16.msra.mxu0 0
    %318 = vmatprep.subr.bf16.mxu0 0
    %319 = vmatpush2.bf16.msra.mxu0 0
    %320 = vmatprep.subr.bf16.mxu0 0
    %321 = vmatpush2.bf16.msra.mxu0 0
    %322 = vmatprep.subr.bf16.mxu0 0
    %323 = vmatpush2.bf16.msra.mxu0 0
    %324 = vmatprep.subr.bf16.mxu0 0
    %325 = vmatpush2.bf16.msra.mxu0 0
    %326 = vmatprep.mubr.bf16.mxu0 0
    %327 = vmatmul.mubr.bf16.gmra.mxu0 %v271
    %v328 = vpop.f32.mrf.mxu0
    %v329 = vadd.f32 %v202, %v328
    %v330 = vpop.f32.mrf.mxu0
    %v331 = vadd.f32 %v206, %v330
    %v332 = vpop.f32.mrf.mxu0
    %v333 = vadd.f32 %v202, %v332
    %v334 = vpop.f32.mrf.mxu0
    %v335 = vadd.f32 %v206, %v334
    %336 = vmatprep.mubr.bf16.mxu0 0
    %337 = vmatmul.mubr.bf16.gmra.mxu0 %v274
    %v338 = vpop.f32.mrf.mxu0
    %v339 = vadd.f32 %v202, %v338
    %v340 = vpop.f32.mrf.mxu0
    %v341 = vadd.f32 %v206, %v340
    %v342 = vpop.f32.mrf.mxu0
    %v343 = vadd.f32 %v202, %v342
    %v344 = vpop.f32.mrf.mxu0
    %v345 = vadd.f32 %v206, %v344
    %346 = vmatprep.mubr.bf16.mxu0 0
    %347 = vmatmul.mubr.bf16.gmra.mxu0 %v277
    %v348 = vpop.f32.mrf.mxu0
    %v349 = vadd.f32 %v202, %v348
    %v350 = vpop.f32.mrf.mxu0
    %v351 = vadd.f32 %v206, %v350
    %v352 = vpop.f32.mrf.mxu0
    %v353 = vadd.f32 %v202, %v352
    %v354 = vpop.f32.mrf.mxu0
    %v355 = vadd.f32 %v206, %v354
    %356 = vmatprep.mubr.bf16.mxu0 0
    %357 = vmatmul.mubr.bf16.gmra.mxu0 %v280
    %v358 = vpop.f32.mrf.mxu0
    %v359 = vadd.f32 %v202, %v358
    %v360 = vpop.f32.mrf.mxu0
    %v361 = vadd.f32 %v206, %v360
    %v362 = vpop.f32.mrf.mxu0
    %v363 = vadd.f32 %v202, %v362
    %v364 = vpop.f32.mrf.mxu0
    %v365 = vadd.f32 %v206, %v364
    %366 = vmatprep.mubr.bf16.mxu0 0
    %367 = vmatmul.mubr.bf16.gmra.mxu0 %v283
    %v368 = vpop.f32.mrf.mxu0
    %v369 = vadd.f32 %v202, %v368
    %v370 = vpop.f32.mrf.mxu0
    %v371 = vadd.f32 %v206, %v370
    %v372 = vpop.f32.mrf.mxu0
    %v373 = vadd.f32 %v202, %v372
    %v374 = vpop.f32.mrf.mxu0
    %v375 = vadd.f32 %v206, %v374
    %376 = vmatprep.mubr.bf16.mxu0 0
    %377 = vmatmul.mubr.bf16.gmra.mxu0 %v286
    %v378 = vpop.f32.mrf.mxu0
    %v379 = vadd.f32 %v202, %v378
    %v380 = vpop.f32.mrf.mxu0
    %v381 = vadd.f32 %v206, %v380
    %v382 = vpop.f32.mrf.mxu0
    %v383 = vadd.f32 %v202, %v382
    %v384 = vpop.f32.mrf.mxu0
    %v385 = vadd.f32 %v206, %v384
    %386 = vmatprep.mubr.bf16.mxu0 0
    %387 = vmatmul.mubr.bf16.gmra.mxu0 %v289
    %v388 = vpop.f32.mrf.mxu0
    %v389 = vadd.f32 %v202, %v388
    %v390 = vpop.f32.mrf.mxu0
    %v391 = vadd.f32 %v206, %v390
    %v392 = vpop.f32.mrf.mxu0
    %v393 = vadd.f32 %v202, %v392
    %v394 = vpop.f32.mrf.mxu0
    %v395 = vadd.f32 %v206, %v394
    %396 = vmatprep.mubr.bf16.mxu0 0
    %397 = vmatmul.mubr.bf16.gmra.mxu0 %v292
    %v398 = vpop.f32.mrf.mxu0
    %v399 = vadd.f32 %v202, %v398
    %v400 = vpop.f32.mrf.mxu0
    %v401 = vadd.f32 %v206, %v400
    %v402 = vpop.f32.mrf.mxu0
    %v403 = vadd.f32 %v202, %v402
    %v404 = vpop.f32.mrf.mxu0
    %v405 = vadd.f32 %v206, %v404
    %406 = vdwg.mxu0
    %v407 = vmax.f32 %v329, 0.0
    %v408 = vmax.f32 %v331, 0.0
    %v409 = vmax.f32 %v333, 0.0
    %v410 = vmax.f32 %v335, 0.0
    %v411 = vmax.f32 %v339, 0.0
    %v412 = vmax.f32 %v341, 0.0
    %v413 = vmax.f32 %v343, 0.0
    %v414 = vmax.f32 %v345, 0.0
    %v415 = vmax.f32 %v349, 0.0
    %v416 = vmax.f32 %v351, 0.0
    %v417 = vmax.f32 %v353, 0.0
    %v418 = vmax.f32 %v355, 0.0
    %v419 = vmax.f32 %v359, 0.0
    %v420 = vmax.f32 %v361, 0.0
    %v421 = vmax.f32 %v363, 0.0
    %v422 = vmax.f32 %v365, 0.0
    %v423 = vmax.f32 %v369, 0.0
    %v424 = vmax.f32 %v371, 0.0
    %v425 = vmax.f32 %v373, 0.0
    %v426 = vmax.f32 %v375, 0.0
    %v427 = vmax.f32 %v379, 0.0
    %v428 = vmax.f32 %v381, 0.0
    %v429 = vmax.f32 %v383, 0.0
    %v430 = vmax.f32 %v385, 0.0
    %v431 = vmax.f32 %v389, 0.0
    %v432 = vmax.f32 %v391, 0.0
    %v433 = vmax.f32 %v393, 0.0
    %v434 = vmax.f32 %v395, 0.0
    %v435 = vmax.f32 %v399, 0.0
    %v436 = vmax.f32 %v401, 0.0
    %v437 = vmax.f32 %v403, 0.0
    %v438 = vmax.f32 %v405, 0.0
    %v439 = vpack.c.bf16 %v409, %v407
    %v440 = vpack.c.bf16 %v410, %v408
    %v441 = vpack.c.bf16 %v413, %v411
    %v442 = vpack.c.bf16 %v414, %v412
    %v443 = vpack.c.bf16 %v417, %v415
    %v444 = vpack.c.bf16 %v418, %v416
    %v445 = vpack.c.bf16 %v421, %v419
    %v446 = vpack.c.bf16 %v422, %v420
    %v447 = vpack.c.bf16 %v425, %v423
    %v448 = vpack.c.bf16 %v426, %v424
    %v449 = vpack.c.bf16 %v429, %v427
    %v450 = vpack.c.bf16 %v430, %v428
    %v451 = vpack.c.bf16 %v433, %v431
    %v452 = vpack.c.bf16 %v434, %v432
    %v453 = vpack.c.bf16 %v437, %v435
    %v454 = vpack.c.bf16 %v438, %v436
    %v455 = vld [vmem:[#allocation8] sm:$0xf]
    %v456 = vld [vmem:[#allocation8 + $0x4] sm:$0xf]
    %v457 = vld [vmem:[#allocation8 + $0x8] sm:$0xf]
    %v458 = vld [vmem:[#allocation8 + $0xc] sm:$0xf]
    %v459 = vld [vmem:[#allocation8 + $0x10] sm:$0xf]
    %v460 = vld [vmem:[#allocation8 + $0x14] sm:$0xf]
    %v461 = vld [vmem:[#allocation8 + $0x18] sm:$0xf]
    %v462 = vld [vmem:[#allocation8 + $0x1c] sm:$0xf]
    %v463 = vld [vmem:[#allocation8 + $0x20] sm:$0xf]
    %v464 = vld [vmem:[#allocation8 + $0x24] sm:$0xf]
    %v465 = vld [vmem:[#allocation8 + $0x28] sm:$0xf]
    %v466 = vld [vmem:[#allocation8 + $0x2c] sm:$0xf]
    %v467 = vld [vmem:[#allocation8 + $0x30] sm:$0xf]
    %v468 = vld [vmem:[#allocation8 + $0x34] sm:$0xf]
    %v469 = vld [vmem:[#allocation8 + $0x38] sm:$0xf]
    %v470 = vld [vmem:[#allocation8 + $0x3c] sm:$0xf]
    %v471 = vld [vmem:[#allocation8 + $0x40] sm:$0xf]
    %v472 = vld [vmem:[#allocation8 + $0x44] sm:$0xf]
    %v473 = vld [vmem:[#allocation8 + $0x48] sm:$0xf]
    %v474 = vld [vmem:[#allocation8 + $0x4c] sm:$0xf]
    %v475 = vld [vmem:[#allocation8 + $0x50] sm:$0xf]
    %v476 = vld [vmem:[#allocation8 + $0x54] sm:$0xf]
    %v477 = vld [vmem:[#allocation8 + $0x58] sm:$0xf]
    %v478 = vld [vmem:[#allocation8 + $0x5c] sm:$0xf]
    %v479 = vld [vmem:[#allocation8 + $0x60] sm:$0xf]
    %v480 = vld [vmem:[#allocation8 + $0x64] sm:$0xf]
    %v481 = vld [vmem:[#allocation8 + $0x68] sm:$0xf]
    %v482 = vld [vmem:[#allocation8 + $0x6c] sm:$0xf]
    %v483 = vld [vmem:[#allocation8 + $0x70] sm:$0xf]
    %v484 = vld [vmem:[#allocation8 + $0x74] sm:$0xf]
    %v485 = vld [vmem:[#allocation8 + $0x78] sm:$0xf]
    %v486 = vld [vmem:[#allocation8 + $0x7c] sm:$0xf]
    %v519 = vunpack.c.l.b16 %v455
    %v520 = vunpack.c.l.b16 %v456
    %v521 = vunpack.c.l.b16 %v457
    %v522 = vunpack.c.l.b16 %v458
    %v523 = vunpack.c.l.b16 %v459
    %v524 = vunpack.c.l.b16 %v460
    %v525 = vunpack.c.l.b16 %v461
    %v526 = vunpack.c.l.b16 %v462
    %v527 = vunpack.c.l.b16 %v463
    %v528 = vunpack.c.l.b16 %v464
    %v529 = vunpack.c.l.b16 %v465
    %v530 = vunpack.c.l.b16 %v466
    %v531 = vunpack.c.l.b16 %v467
    %v532 = vunpack.c.l.b16 %v468
    %v533 = vunpack.c.l.b16 %v469
    %v534 = vunpack.c.l.b16 %v470
    %v535 = vunpack.c.l.b16 %v471
    %v536 = vunpack.c.l.b16 %v472
    %v537 = vunpack.c.l.b16 %v473
    %v538 = vunpack.c.l.b16 %v474
    %v539 = vunpack.c.l.b16 %v475
    %v540 = vunpack.c.l.b16 %v476
    %v541 = vunpack.c.l.b16 %v477
    %v542 = vunpack.c.l.b16 %v478
    %v543 = vunpack.c.l.b16 %v479
    %v544 = vunpack.c.l.b16 %v480
    %v545 = vunpack.c.l.b16 %v481
    %v546 = vunpack.c.l.b16 %v482
    %v547 = vunpack.c.l.b16 %v483
    %v548 = vunpack.c.l.b16 %v484
    %v549 = vunpack.c.l.b16 %v485
    %v550 = vunpack.c.l.b16 %v486
    %v551 = vpack.c.b16 %v520, %v519
    %v552 = vpack.c.b16 %v522, %v521
    %v553 = vpack.c.b16 %v524, %v523
    %v554 = vpack.c.b16 %v526, %v525
    %v555 = vpack.c.b16 %v528, %v527
    %v556 = vpack.c.b16 %v530, %v529
    %v557 = vpack.c.b16 %v532, %v531
    %v558 = vpack.c.b16 %v534, %v533
    %v559 = vpack.c.b16 %v536, %v535
    %v560 = vpack.c.b16 %v538, %v537
    %v561 = vpack.c.b16 %v540, %v539
    %v562 = vpack.c.b16 %v542, %v541
    %v563 = vpack.c.b16 %v544, %v543
    %v564 = vpack.c.b16 %v546, %v545
    %v565 = vpack.c.b16 %v548, %v547
    %v566 = vpack.c.b16 %v550, %v549
    %583 = vmatprep.subr.bf16.mxu0 0
    %584 = vmatpush1.bf16.msra.mxu0 %v558
    %585 = vmatprep.subr.bf16.mxu0 0
    %586 = vmatpush1.bf16.msra.mxu0 %v557
    %587 = vmatprep.subr.bf16.mxu0 0
    %588 = vmatpush1.bf16.msra.mxu0 %v556
    %589 = vmatprep.subr.bf16.mxu0 0
    %590 = vmatpush1.bf16.msra.mxu0 %v555
    %591 = vmatprep.subr.bf16.mxu0 0
    %592 = vmatpush1.bf16.msra.mxu0 %v554
    %593 = vmatprep.subr.bf16.mxu0 0
    %594 = vmatpush1.bf16.msra.mxu0 %v553
    %595 = vmatprep.subr.bf16.mxu0 0
    %596 = vmatpush1.bf16.msra.mxu0 %v552
    %597 = vmatprep.subr.bf16.mxu0 0
    %598 = vmatpush1.bf16.msra.mxu0 %v551
    %599 = vmatprep.subr.bf16.mxu0 0
    %600 = vmatpush2.bf16.msra.mxu0 %v566
    %601 = vmatprep.subr.bf16.mxu0 0
    %602 = vmatpush2.bf16.msra.mxu0 %v565
    %603 = vmatprep.subr.bf16.mxu0 0
    %604 = vmatpush2.bf16.msra.mxu0 %v564
    %605 = vmatprep.subr.bf16.mxu0 0
    %606 = vmatpush2.bf16.msra.mxu0 %v563
    %607 = vmatprep.subr.bf16.mxu0 0
    %608 = vmatpush2.bf16.msra.mxu0 %v562
    %609 = vmatprep.subr.bf16.mxu0 0
    %610 = vmatpush2.bf16.msra.mxu0 %v561
    %611 = vmatprep.subr.bf16.mxu0 0
    %612 = vmatpush2.bf16.msra.mxu0 %v560
    %613 = vmatprep.subr.bf16.mxu0 0
    %614 = vmatpush2.bf16.msra.mxu0 %v559
    %615 = vmatprep.mubr.bf16.mxu0 %v440
    %616 = vmatmul.mubr.bf16.gmra.mxu0 %v439
    %v617 = vpop.f32.mrf.mxu0
    %v618 = vadd.f32 0.0, %v617
    %v619 = vpop.f32.mrf.mxu0
    %v620 = vpop.f32.mrf.mxu0
    %v621 = vadd.f32 0.0, %v620
    %v622 = vpop.f32.mrf.mxu0
    %623 = vmatprep.mubr.bf16.mxu0 %v442
    %624 = vmatmul.mubr.bf16.gmra.mxu0 %v441
    %v625 = vpop.f32.mrf.mxu0
    %v626 = vadd.f32 0.0, %v625
    %v627 = vpop.f32.mrf.mxu0
    %v628 = vpop.f32.mrf.mxu0
    %v629 = vadd.f32 0.0, %v628
    %v630 = vpop.f32.mrf.mxu0
    %631 = vmatprep.mubr.bf16.mxu0 %v444
    %632 = vmatmul.mubr.bf16.gmra.mxu0 %v443
    %v633 = vpop.f32.mrf.mxu0
    %v634 = vadd.f32 0.0, %v633
    %v635 = vpop.f32.mrf.mxu0
    %v636 = vpop.f32.mrf.mxu0
    %v637 = vadd.f32 0.0, %v636
    %v638 = vpop.f32.mrf.mxu0
    %639 = vmatprep.mubr.bf16.mxu0 %v446
    %640 = vmatmul.mubr.bf16.gmra.mxu0 %v445
    %v641 = vpop.f32.mrf.mxu0
    %v642 = vadd.f32 0.0, %v641
    %v643 = vpop.f32.mrf.mxu0
    %v644 = vpop.f32.mrf.mxu0
    %v645 = vadd.f32 0.0, %v644
    %v646 = vpop.f32.mrf.mxu0
    %647 = vmatprep.mubr.bf16.mxu0 %v448
    %648 = vmatmul.mubr.bf16.gmra.mxu0 %v447
    %v649 = vpop.f32.mrf.mxu0
    %v650 = vadd.f32 0.0, %v649
    %v651 = vpop.f32.mrf.mxu0
    %v652 = vpop.f32.mrf.mxu0
    %v653 = vadd.f32 0.0, %v652
    %v654 = vpop.f32.mrf.mxu0
    %655 = vmatprep.mubr.bf16.mxu0 %v450
    %656 = vmatmul.mubr.bf16.gmra.mxu0 %v449
    %v657 = vpop.f32.mrf.mxu0
    %v658 = vadd.f32 0.0, %v657
    %v659 = vpop.f32.mrf.mxu0
    %v660 = vpop.f32.mrf.mxu0
    %v661 = vadd.f32 0.0, %v660
    %v662 = vpop.f32.mrf.mxu0
    %663 = vmatprep.mubr.bf16.mxu0 %v452
    %664 = vmatmul.mubr.bf16.gmra.mxu0 %v451
    %v665 = vpop.f32.mrf.mxu0
    %v666 = vadd.f32 0.0, %v665
    %v667 = vpop.f32.mrf.mxu0
    %v668 = vpop.f32.mrf.mxu0
    %v669 = vadd.f32 0.0, %v668
    %v670 = vpop.f32.mrf.mxu0
    %671 = vmatprep.mubr.bf16.mxu0 %v454
    %672 = vmatmul.mubr.bf16.gmra.mxu0 %v453
    %v673 = vpop.f32.mrf.mxu0
    %v674 = vadd.f32 0.0, %v673
    %v675 = vpop.f32.mrf.mxu0
    %v676 = vpop.f32.mrf.mxu0
    %v677 = vadd.f32 0.0, %v676
    %v678 = vpop.f32.mrf.mxu0
    %679 = vdwg.mxu0
    %v680 = vld [vmem:[%s4] sm:$0x1]
    %v682 = vlaneseq
    %v683 = vshrl.u32 %v682, 7
    %v684 = vsub.s32 0, %v683
    %v685 = vrot.slane %v680, %v684
    %v687 = vadd.f32 %v618, %v685
    %v688 = vadd.f32 %v621, %v685
    %v689 = vadd.f32 %v626, %v685
    %v690 = vadd.f32 %v629, %v685
    %v691 = vadd.f32 %v634, %v685
    %v692 = vadd.f32 %v637, %v685
    %v693 = vadd.f32 %v642, %v685
    %v694 = vadd.f32 %v645, %v685
    %v695 = vadd.f32 %v650, %v685
    %v696 = vadd.f32 %v653, %v685
    %v697 = vadd.f32 %v658, %v685
    %v698 = vadd.f32 %v661, %v685
    %v699 = vadd.f32 %v666, %v685
    %v700 = vadd.f32 %v669, %v685
    %v701 = vadd.f32 %v674, %v685
    %v702 = vadd.f32 %v677, %v685
    %vm703 = vcmask 64512
    %704 = vst.msk [vmem:[#allocation9] sm:$0xff] %vm703, %v687
    %705 = vst.msk [vmem:[#allocation9 + $0x8] sm:$0xff] %vm703, %v688
    %706 = vst.msk [vmem:[#allocation9 + $0x10] sm:$0xff] %vm703, %v689
    %707 = vst.msk [vmem:[#allocation9 + $0x18] sm:$0xff] %vm703, %v690
    %708 = vst.msk [vmem:[#allocation9 + $0x20] sm:$0xff] %vm703, %v691
    %709 = vst.msk [vmem:[#allocation9 + $0x28] sm:$0xff] %vm703, %v692
    %710 = vst.msk [vmem:[#allocation9 + $0x30] sm:$0xff] %vm703, %v693
    %711 = vst.msk [vmem:[#allocation9 + $0x38] sm:$0xff] %vm703, %v694
    %712 = vst.msk [vmem:[#allocation9 + $0x40] sm:$0xff] %vm703, %v695
    %713 = vst.msk [vmem:[#allocation9 + $0x48] sm:$0xff] %vm703, %v696
    %714 = vst.msk [vmem:[#allocation9 + $0x50] sm:$0xff] %vm703, %v697
    %715 = vst.msk [vmem:[#allocation9 + $0x58] sm:$0xff] %vm703, %v698
    %716 = vst.msk [vmem:[#allocation9 + $0x60] sm:$0xff] %vm703, %v699
    %717 = vst.msk [vmem:[#allocation9 + $0x68] sm:$0xff] %vm703, %v700
    %718 = vst.msk [vmem:[#allocation9 + $0x70] sm:$0xff] %vm703, %v701
    %719 = vst.msk [vmem:[#allocation9 + $0x78] sm:$0xff] %vm703, %v702
    // Predicated region
    $region34: #{mlp_forward.1} parent=1 // pred_check
      _
    $region35: #{mlp_forward.1} parent=1 // pred_check_branch
      %721 = sbr.rel (0) target = $region37
    $region36: #{mlp_forward.1} parent=1 // pred_region
      %s723 = ssub.s32 2048, 128
      %724 = vsyncadd [#allocation5], %s723
      %s725 = sshll.u32 [#allocation9], 4
      %s726 = int_to_ptr.vmem [resolvable:$true] %s725
      %731 = dma.vmem_to_hbm [thread:$0]  %s726, 128, %s5, [#allocation5], 128, 128, 8
    $region37: #{mlp_forward.1} parent=1 // pred_fallthru
      _
    // Predicated region
    $region38: #{mlp_forward.1} parent=1 // pred_check
      _
    $region39: #{mlp_forward.1} parent=1 // pred_check_branch
      %733 = sbr.rel (0) target = $region41
    $region40: #{mlp_forward.1} parent=1 // pred_region
      %734 = dma.done [#allocation5], 2048
    $region41: #{mlp_forward.1} parent=1 // pred_fallthru
      _
    %735 = vsyncpa [#allocation4], 1
    %736 = vsyncpa [#allocation7], 1
    %737 = vsyncpa [#allocation5], 1

</llo_original>
